<compile_context>
chip_gen: v6e
topology: v6e:2x2x1
jax: 0.10.0
libtpu: 0.0.40
codegen_flags: <defaults>
</compile_context>

<pallas_src>
import functools

import jax
import jax.numpy as jnp
from jax.experimental import pallas as pl
from jax.experimental.pallas import tpu as pltpu

_SUBLANE = 8        # row tiles kept as multiples of the vreg sublane count
_TARGET_STEPS = 4   # aim for >= 4 grid steps: pipelining + 2-TC sharding on v7x


def _round_up(x, m):
    return ((x + m - 1) // m) * m


def _fused_mlp_kernel(x_ref, *rest, num_layers, compute_dtype):
    """rest = (w0, b0, w1, b1, ..., out_ref).  All refs are VMEM tiles.

    h = relu(h @ W_l + b_l) for every layer; the intermediate activation stays
    on-chip.  Matmul operands are `compute_dtype` (weights pre-cast in the
    wrapper, activation cast once here); accumulation, bias add and ReLU are
    float32 on every generation (v5e VPU has no bf16 VALU).
    """
    out_ref = rest[-1]
    wb_refs = rest[:-1]

    # Single cast of the activation tile to the MXU operand dtype.
    h = x_ref[...].astype(compute_dtype)
    for l in range(num_layers):
        w = wb_refs[2 * l][...]            # already compute_dtype (pre-cast once)
        b = wb_refs[2 * l + 1][...]        # (1, F_out), float32
        y = jnp.dot(h, w, preferred_element_type=jnp.float32)
        a = jnp.maximum(y + b, 0.0)        # f32 bias + ReLU
        h = a if l == num_layers - 1 else a.astype(compute_dtype)
    out_ref[...] = h.astype(out_ref.dtype)


@functools.partial(jax.jit, static_argnums=(2, 3))
def _mlp_forward_jit(x, params, block_rows, compute_dtype_name):
    compute_dtype = jnp.dtype(compute_dtype_name)

    B, F_in = x.shape
    num_layers = len(params)
    assert params[0][0].shape[0] == F_in, (params[0][0].shape, F_in)
    F_out = params[-1][0].shape[1]

    # Batch-aware row tile: large enough to amortize per-step overhead, small
    # enough that mid-size batches still get >= ~_TARGET_STEPS grid steps.
    tm = min(int(block_rows), _round_up(pl.cdiv(B, _TARGET_STEPS), _SUBLANE))
    tm = max(tm, _SUBLANE)
    grid = (pl.cdiv(B, tm),)   # ragged last block: Pallas masks OOB stores

    # x at its logical width (block last-dim == full array dim is legal),
    # weights pre-cast once to the MXU operand dtype, biases kept in f32.
    flat_inputs = [x]
    in_specs = [pl.BlockSpec((tm, F_in), lambda i: (i, 0))]
    for w, b in params:
        fin, fout = w.shape
        flat_inputs.append(w.astype(compute_dtype))
        flat_inputs.append(b.reshape(1, fout).astype(jnp.float32))
        # Constant block index -> fetched once, VMEM-resident across the grid.
        in_specs.append(pl.BlockSpec((fin, fout), lambda i: (0, 0)))
        in_specs.append(pl.BlockSpec((1, fout), lambda i: (0, 0)))
    out_specs = pl.BlockSpec((tm, F_out), lambda i: (i, 0))

    dims = [F_in] + [w.shape[1] for w, _ in params]
    flops = sum(2 * B * dims[l] * dims[l + 1] for l in range(num_layers))
    bytes_accessed = sum(int(a.size) * a.dtype.itemsize for a in flat_inputs)
    bytes_accessed += B * F_out * x.dtype.itemsize

    kernel = functools.partial(
        _fused_mlp_kernel, num_layers=num_layers, compute_dtype=compute_dtype
    )

    return pl.pallas_call(
        kernel,
        out_shape=jax.ShapeDtypeStruct((B, F_out), x.dtype),
        grid_spec=pltpu.PrefetchScalarGridSpec(
            num_scalar_prefetch=0,
            grid=grid,
            in_specs=in_specs,
            out_specs=out_specs,
        ),
        compiler_params=pltpu.CompilerParams(
            # Batch axis is independent across tiles -> shardable across TCs.
            dimension_semantics=("parallel",),
        ),
        cost_estimate=pl.CostEstimate(
            flops=flops, transcendentals=0, bytes_accessed=bytes_accessed
        ),
    )(*flat_inputs)


def mlp_forward(x, params, block_rows=1024, compute_dtype=jnp.bfloat16):
    """Fused Pallas MLP forward.

    compute_dtype sets the MXU operand dtype (bf16 default: best on v5e's
    128x128 MXU and removes the slow f32 path on v6e/v7x); accumulation, bias
    add and ReLU remain float32.  Pass jnp.float32 for exact f32 matmuls.
    """
    cd_name = jnp.dtype(compute_dtype).name
    return _mlp_forward_jit(
        x, tuple((w, b) for w, b in params), int(block_rows), cd_name
    )


def init_mlp_params(key, num_mlp_layers, emb_size, hidden_size, dtype=jnp.float32):
    """Deterministic synthetic parameters matching the PyTorch module's shapes."""
    params = []
    for i in range(num_mlp_layers):
        num_features = emb_size if i == 0 else hidden_size
        num_hidden = emb_size if i == num_mlp_layers - 1 else hidden_size
        in_dim = num_features * 2 if i == 0 else num_features
        out_dim = num_hidden
        key, wk, bk = jax.random.split(key, 3)
        scale = 1.0 / jnp.sqrt(jnp.asarray(in_dim, dtype=jnp.float32))
        # stored as (in_dim, out_dim) -> y = x @ W + b
        w = jax.random.uniform(wk, (in_dim, out_dim), dtype, -scale, scale)
        b = jax.random.uniform(bk, (out_dim,), dtype, -scale, scale)
        params.append((w, b))
    return params


def mlp_reference(x, params):
    """Plain-JAX reference for correctness checking."""
    for w, b in params:
        x = jnp.maximum(x @ w + b, 0.0)
    return x


if __name__ == "__main__":
    # Config consistent with the module: num_mlp_layers=3, emb_size=32,
    # hidden_size=64 -> input is (batch, emb_size * 2).
    num_mlp_layers = 3
    emb_size = 32
    hidden_size = 64
    batch = 8

    key = jax.random.PRNGKey(0)
    key, xk = jax.random.split(key)
    x = jax.random.normal(xk, (batch, emb_size * 2), dtype=jnp.float32)
    params = init_mlp_params(key, num_mlp_layers, emb_size, hidden_size)
    ref = mlp_reference(x, params)

    # f32 MXU path (exact vs reference).
    out_f32 = jax.block_until_ready(
        mlp_forward(x, params, compute_dtype=jnp.float32)
    )
    assert out_f32.shape == (batch, emb_size), out_f32.shape
    assert jnp.allclose(out_f32, ref, atol=1e-5, rtol=1e-5), "f32 mismatch"

    # Default path: bf16 MXU operands, f32 accumulation — looser tolerance.
    out_bf16 = jax.block_until_ready(mlp_forward(x, params))
    assert out_bf16.shape == (batch, emb_size), out_bf16.shape
    assert jnp.allclose(out_bf16, ref, atol=5e-2, rtol=5e-2), "bf16 mismatch"

    # Larger, ragged batch: B=1003 -> tm=256, grid=4, last block partial.
    # Exercises unpadded input, multi-step pipelined grid, and masked stores
    # on the uneven final block (no wrapper pad / slice anywhere).
    key, xk2 = jax.random.split(key)
    x_big = jax.random.normal(xk2, (1003, emb_size * 2), dtype=jnp.float32)
    out_big = jax.block_until_ready(
        mlp_forward(x_big, params, compute_dtype=jnp.float32)
    )
    ref_big = mlp_reference(x_big, params)
    assert out_big.shape == (1003, emb_size), out_big.shape
    assert jnp.allclose(out_big, ref_big, atol=1e-5, rtol=1e-5), "ragged mismatch"

    # TODO(synk): nn.Dropout is constructed in __init__ but never used in
    # forward(), so it is intentionally not implemented.

    print("KERNEL_OK")
</pallas_src>

<mosaic_0001>
module attributes {stable_mosaic.version = 11 : i64} {
  func.func @_fused_mlp_kernel(%arg0: i32, %arg1: memref<8x64xf32, #tpu.memory_space<vmem>>, %arg2: memref<64x64xf32, #tpu.memory_space<vmem>>, %arg3: memref<1x64xf32, #tpu.memory_space<vmem>>, %arg4: memref<64x64xf32, #tpu.memory_space<vmem>>, %arg5: memref<1x64xf32, #tpu.memory_space<vmem>>, %arg6: memref<64x32xf32, #tpu.memory_space<vmem>>, %arg7: memref<1x32xf32, #tpu.memory_space<vmem>>, %arg8: memref<8x32xf32, #tpu.memory_space<vmem>>) attributes {dimension_semantics = [#tpu.dimension_semantics<parallel>], iteration_bounds = array<i64: 1>, scalar_prefetch = 0 : i64, scratch_operands = 0 : i64, tpu.core_type = #tpu.core_type<tc>, window_params = [{transform_indices = @transform_0, window_bounds = array<i64: 8, 64>}, {pipeline_mode = #tpu.pipeline_mode<synchronous>, transform_indices = @transform_1, window_bounds = array<i64: 64, 64>}, {pipeline_mode = #tpu.pipeline_mode<synchronous>, transform_indices = @transform_2, window_bounds = array<i64: 1, 64>}, {pipeline_mode = #tpu.pipeline_mode<synchronous>, transform_indices = @transform_3, window_bounds = array<i64: 64, 64>}, {pipeline_mode = #tpu.pipeline_mode<synchronous>, transform_indices = @transform_4, window_bounds = array<i64: 1, 64>}, {pipeline_mode = #tpu.pipeline_mode<synchronous>, transform_indices = @transform_5, window_bounds = array<i64: 64, 32>}, {pipeline_mode = #tpu.pipeline_mode<synchronous>, transform_indices = @transform_6, window_bounds = array<i64: 1, 32>}, {transform_indices = @transform_7, window_bounds = array<i64: 8, 32>}]} {
    %c0 = arith.constant 0 : index
    %c0_0 = arith.constant 0 : index
    %0 = vector.load %arg1[%c0, %c0_0] : memref<8x64xf32, #tpu.memory_space<vmem>>, vector<8x64xf32>
    %c0_1 = arith.constant 0 : index
    %c0_2 = arith.constant 0 : index
    %1 = vector.load %arg2[%c0_1, %c0_2] : memref<64x64xf32, #tpu.memory_space<vmem>>, vector<64x64xf32>
    %c0_3 = arith.constant 0 : index
    %c0_4 = arith.constant 0 : index
    %2 = vector.load %arg3[%c0_3, %c0_4] : memref<1x64xf32, #tpu.memory_space<vmem>>, vector<1x64xf32>
    %cst = arith.constant dense<0.000000e+00> : vector<8x64xf32>
    %3 = tpu.matmul %0, %1, %cst {dimension_numbers = #tpu.dot_dimension_numbers<[1], [0], [0], [1], [0, 0, 1, 1], [], []>} : vector<8x64xf32>, vector<64x64xf32>, vector<8x64xf32> -> vector<8x64xf32>
    %4 = vector.broadcast %2 : vector<1x64xf32> to vector<8x64xf32>
    %5 = arith.addf %3, %4 : vector<8x64xf32>
    %cst_5 = arith.constant 0.000000e+00 : f32
    %6 = vector.broadcast %cst_5 : f32 to vector<8x64xf32>
    %7 = arith.maximumf %5, %6 : vector<8x64xf32>
    %c0_6 = arith.constant 0 : index
    %c0_7 = arith.constant 0 : index
    %8 = vector.load %arg4[%c0_6, %c0_7] : memref<64x64xf32, #tpu.memory_space<vmem>>, vector<64x64xf32>
    %c0_8 = arith.constant 0 : index
    %c0_9 = arith.constant 0 : index
    %9 = vector.load %arg5[%c0_8, %c0_9] : memref<1x64xf32, #tpu.memory_space<vmem>>, vector<1x64xf32>
    %cst_10 = arith.constant dense<0.000000e+00> : vector<8x64xf32>
    %10 = tpu.matmul %7, %8, %cst_10 {dimension_numbers = #tpu.dot_dimension_numbers<[1], [0], [0], [1], [0, 0, 1, 1], [], []>} : vector<8x64xf32>, vector<64x64xf32>, vector<8x64xf32> -> vector<8x64xf32>
    %11 = vector.broadcast %9 : vector<1x64xf32> to vector<8x64xf32>
    %12 = arith.addf %10, %11 : vector<8x64xf32>
    %cst_11 = arith.constant 0.000000e+00 : f32
    %13 = vector.broadcast %cst_11 : f32 to vector<8x64xf32>
    %14 = arith.maximumf %12, %13 : vector<8x64xf32>
    %c0_12 = arith.constant 0 : index
    %c0_13 = arith.constant 0 : index
    %15 = vector.load %arg6[%c0_12, %c0_13] : memref<64x32xf32, #tpu.memory_space<vmem>>, vector<64x32xf32>
    %c0_14 = arith.constant 0 : index
    %c0_15 = arith.constant 0 : index
    %16 = vector.load %arg7[%c0_14, %c0_15] : memref<1x32xf32, #tpu.memory_space<vmem>>, vector<1x32xf32>
    %cst_16 = arith.constant dense<0.000000e+00> : vector<8x32xf32>
    %17 = tpu.matmul %14, %15, %cst_16 {dimension_numbers = #tpu.dot_dimension_numbers<[1], [0], [0], [1], [0, 0, 1, 1], [], []>} : vector<8x64xf32>, vector<64x32xf32>, vector<8x32xf32> -> vector<8x32xf32>
    %18 = vector.broadcast %16 : vector<1x32xf32> to vector<8x32xf32>
    %19 = arith.addf %17, %18 : vector<8x32xf32>
    %cst_17 = arith.constant 0.000000e+00 : f32
    %20 = vector.broadcast %cst_17 : f32 to vector<8x32xf32>
    %21 = arith.maximumf %19, %20 : vector<8x32xf32>
    %c0_18 = arith.constant 0 : index
    %c0_19 = arith.constant 0 : index
    %22 = vector.load %arg8[%c0_18, %c0_19] : memref<8x32xf32, #tpu.memory_space<vmem>>, vector<8x32xf32>
    tpu.vector_store %arg8[%c0_18, %c0_19], %21 {strides = array<i32>} : memref<8x32xf32, #tpu.memory_space<vmem>>, vector<8x32xf32>,
    return
  }
  func.func @transform_0(%arg0: i32) -> (i32, i32) {
    %c0_i32 = arith.constant 0 : i32
    %c0_i32_0 = arith.constant 0 : i32
    return %arg0, %c0_i32 : i32, i32
  }
  func.func @transform_1(%arg0: i32) -> (i32, i32) {
    %c0_i32 = arith.constant 0 : i32
    %c0_i32_0 = arith.constant 0 : i32
    %c0_i32_1 = arith.constant 0 : i32
    return %c0_i32, %c0_i32_0 : i32, i32
  }
  func.func @transform_2(%arg0: i32) -> (i32, i32) {
    %c0_i32 = arith.constant 0 : i32
    %c0_i32_0 = arith.constant 0 : i32
    %c0_i32_1 = arith.constant 0 : i32
    return %c0_i32, %c0_i32_0 : i32, i32
  }
  func.func @transform_3(%arg0: i32) -> (i32, i32) {
    %c0_i32 = arith.constant 0 : i32
    %c0_i32_0 = arith.constant 0 : i32
    %c0_i32_1 = arith.constant 0 : i32
    return %c0_i32, %c0_i32_0 : i32, i32
  }
  func.func @transform_4(%arg0: i32) -> (i32, i32) {
    %c0_i32 = arith.constant 0 : i32
    %c0_i32_0 = arith.constant 0 : i32
    %c0_i32_1 = arith.constant 0 : i32
    return %c0_i32, %c0_i32_0 : i32, i32
  }
  func.func @transform_5(%arg0: i32) -> (i32, i32) {
    %c0_i32 = arith.constant 0 : i32
    %c0_i32_0 = arith.constant 0 : i32
    %c0_i32_1 = arith.constant 0 : i32
    return %c0_i32, %c0_i32_0 : i32, i32
  }
  func.func @transform_6(%arg0: i32) -> (i32, i32) {
    %c0_i32 = arith.constant 0 : i32
    %c0_i32_0 = arith.constant 0 : i32
    %c0_i32_1 = arith.constant 0 : i32
    return %c0_i32, %c0_i32_0 : i32, i32
  }
  func.func @transform_7(%arg0: i32) -> (i32, i32) {
    %c0_i32 = arith.constant 0 : i32
    %c0_i32_0 = arith.constant 0 : i32
    return %arg0, %c0_i32 : i32, i32
  }
}

</mosaic_0001>

<llo_original>
// kernel: _mlp_forward_jit.1
$region0: #{_mlp_forward_jit.1}
  #allocation0 [shape = 'u32[]', space=smem, size = 0x4, offset = 0x4, fixed_abs, tag = 'smem constant byte address 0x4 - core index']
  #allocation1 [shape = 'u32[144,128]{1,0:T(1,128)}', space=vmem, size = 0x12000, scoped, tag = 'internal scratch']
  %s0 = inlined_call_operand.vmem [shape: f32[8,64], index: 0, kind: input, shape index: {}]
  %s1 = inlined_call_operand.vmem [shape: f32[64,64], index: 1, kind: input, shape index: {}]
  %s2 = inlined_call_operand.vmem [shape: f32[1,64], index: 2, kind: input, shape index: {}]
  %s3 = inlined_call_operand.hbm [shape: f32[64,64], index: 3, kind: input, shape index: {}]
  %s4 = inlined_call_operand.vmem [shape: f32[1,64], index: 4, kind: input, shape index: {}]
  %s5 = inlined_call_operand.vmem [shape: f32[64,32], index: 5, kind: input, shape index: {}]
  %s6 = inlined_call_operand.vmem [shape: f32[1,32], index: 6, kind: input, shape index: {}]
  %s7 = inlined_call_operand.hbm [shape: f32[8,32], index: 7, kind: output, shape index: {}]
  %s8 = sld [smem:[#allocation0]]
  $region42: #{_mlp_forward_jit.1} parent=0
    _
  %s10 = ssub.s32 1, %s8
  %s11 = scalar_select 0, %s10, %s8
  $region1: #{_mlp_forward_jit.1} parent=0
    #allocation2 [shape = 'u8[32768]{0}', space=vmem, size = 0x8000, scoped, tag = 'input window, operand 3, single buffered']
    #allocation3 [shape = 's32[1]{0}', space=sflag, size = 0x4, scoped, tag = 'scoped memory for _mlp_forward_jit.1']
    #allocation4 [shape = 's32[1]{0}', space=sflag, size = 0x4, scoped, tag = 'scoped memory for _mlp_forward_jit.1']
    #allocation5 [shape = 'u8[4096]{0}', space=vmem, size = 0x1000, scoped, tag = 'output window, operand 0, single buffered']
    %12 = vsyncpa [#allocation3], 0
    %13 = vsyncpa [#allocation4], 0
    // Predicated region
    $region2: #{_mlp_forward_jit.1} parent=1 // pred_check
      _
    $region3: #{_mlp_forward_jit.1} parent=1 // pred_check_branch
      %15 = sbr.rel (0) target = $region5
    $region4: #{_mlp_forward_jit.1} parent=1 // pred_region
      _
    $region5: #{_mlp_forward_jit.1} parent=1 // pred_fallthru
      _
    // Predicated region
    $region6: #{_mlp_forward_jit.1} parent=1 // pred_check
      _
    $region7: #{_mlp_forward_jit.1} parent=1 // pred_check_branch
      %17 = sbr.rel (0) target = $region9
    $region8: #{_mlp_forward_jit.1} parent=1 // pred_region
      _
    $region9: #{_mlp_forward_jit.1} parent=1 // pred_fallthru
      _
    // Predicated region
    $region10: #{_mlp_forward_jit.1} parent=1 // pred_check
      _
    $region11: #{_mlp_forward_jit.1} parent=1 // pred_check_branch
      %19 = sbr.rel (0) target = $region13
    $region12: #{_mlp_forward_jit.1} parent=1 // pred_region
      _
    $region13: #{_mlp_forward_jit.1} parent=1 // pred_fallthru
      _
    // Predicated region
    $region14: #{_mlp_forward_jit.1} parent=1 // pred_check
      _
    $region15: #{_mlp_forward_jit.1} parent=1 // pred_check_branch
      %21 = sbr.rel (0) target = $region17
    $region16: #{_mlp_forward_jit.1} parent=1 // pred_region
      %s23 = ssub.s32 1024, 1024
      %24 = vsyncadd [#allocation3], %s23
      %s25 = sshll.u32 [#allocation2], 4
      %s26 = int_to_ptr.vmem [resolvable:$true] %s25
      %31 = dma.hbm_to_vmem [thread:$0]  %s3, 1024, %s26, [#allocation3], 128, 128, 8
    $region17: #{_mlp_forward_jit.1} parent=1 // pred_fallthru
      _
    // Predicated region
    $region18: #{_mlp_forward_jit.1} parent=1 // pred_check
      _
    $region19: #{_mlp_forward_jit.1} parent=1 // pred_check_branch
      %33 = sbr.rel (0) target = $region21
    $region20: #{_mlp_forward_jit.1} parent=1 // pred_region
      _
    $region21: #{_mlp_forward_jit.1} parent=1 // pred_fallthru
      _
    // Predicated region
    $region22: #{_mlp_forward_jit.1} parent=1 // pred_check
      _
    $region23: #{_mlp_forward_jit.1} parent=1 // pred_check_branch
      %35 = sbr.rel (0) target = $region25
    $region24: #{_mlp_forward_jit.1} parent=1 // pred_region
      _
    $region25: #{_mlp_forward_jit.1} parent=1 // pred_fallthru
      _
    // Predicated region
    $region26: #{_mlp_forward_jit.1} parent=1 // pred_check
      _
    $region27: #{_mlp_forward_jit.1} parent=1 // pred_check_branch
      %37 = sbr.rel (0) target = $region29
    $region28: #{_mlp_forward_jit.1} parent=1 // pred_region
      _
    $region29: #{_mlp_forward_jit.1} parent=1 // pred_fallthru
      _
    // Predicated region
    $region30: #{_mlp_forward_jit.1} parent=1 // pred_check
      _
    $region31: #{_mlp_forward_jit.1} parent=1 // pred_check_branch
      %39 = sbr.rel (0) target = $region33
    $region32: #{_mlp_forward_jit.1} parent=1 // pred_region
      %40 = dma.done [#allocation3], 1024
    $region33: #{_mlp_forward_jit.1} parent=1 // pred_fallthru
      _
    %v41 = vld [vmem:[%s0] sm:$0xff]
    %v42 = vld [vmem:[%s1] sm:$0xff]
    %v43 = vld [vmem:[%s1 + $0x8] sm:$0xff]
    %v44 = vld [vmem:[%s1 + $0x10] sm:$0xff]
    %v45 = vld [vmem:[%s1 + $0x18] sm:$0xff]
    %v46 = vld [vmem:[%s1 + $0x20] sm:$0xff]
    %v47 = vld [vmem:[%s1 + $0x28] sm:$0xff]
    %v48 = vld [vmem:[%s1 + $0x30] sm:$0xff]
    %v49 = vld [vmem:[%s1 + $0x38] sm:$0xff]
    %v50 = vld [vmem:[%s2] sm:$0x1]
    %v52 = vlaneseq
    %v53 = vshrl.u32 %v52, 7
    %v54 = vsub.s32 0, %v53
    %v55 = vrot.slane %v50, %v54
    %vm57 = vcmask 523264
    %v59 = vsel %vm57, %v41, 0
    %61 = vmatprep.subr.mxu0 0.0
    %62 = vmatpush1.msra.mxu0 0.0
    %63 = vmatprep.subr.mxu0 0.0
    %64 = vmatpush1.msra.mxu0 0.0
    %65 = vmatprep.subr.mxu0 0.0
    %66 = vmatpush1.msra.mxu0 0.0
    %67 = vmatprep.subr.mxu0 0.0
    %68 = vmatpush1.msra.mxu0 0.0
    %69 = vmatprep.subr.mxu0 0.0
    %70 = vmatpush1.msra.mxu0 0.0
    %71 = vmatprep.subr.mxu0 0.0
    %72 = vmatpush1.msra.mxu0 0.0
    %73 = vmatprep.subr.mxu0 0.0
    %74 = vmatpush1.msra.mxu0 0.0
    %75 = vmatprep.subr.mxu0 0.0
    %76 = vmatpush1.msra.mxu0 0.0
    %77 = vmatprep.subr.mxu0 0.0
    %78 = vmatpush1.msra.mxu0 %v49
    %79 = vmatprep.subr.mxu0 0.0
    %80 = vmatpush1.msra.mxu0 %v48
    %81 = vmatprep.subr.mxu0 0.0
    %82 = vmatpush1.msra.mxu0 %v47
    %83 = vmatprep.subr.mxu0 0.0
    %84 = vmatpush1.msra.mxu0 %v46
    %85 = vmatprep.subr.mxu0 0.0
    %86 = vmatpush1.msra.mxu0 %v45
    %87 = vmatprep.subr.mxu0 0.0
    %88 = vmatpush1.msra.mxu0 %v44
    %89 = vmatprep.subr.mxu0 0.0
    %90 = vmatpush1.msra.mxu0 %v43
    %91 = vmatprep.subr.mxu0 0.0
    %92 = vmatpush1.msra.mxu0 %v42
    %93 = vmatprep.subr.mxu0 0.0
    %94 = vmatpush2.msra.mxu0 0.0
    %95 = vmatprep.subr.mxu0 0.0
    %96 = vmatpush2.msra.mxu0 0.0
    %97 = vmatprep.subr.mxu0 0.0
    %98 = vmatpush2.msra.mxu0 0.0
    %99 = vmatprep.subr.mxu0 0.0
    %100 = vmatpush2.msra.mxu0 0.0
    %101 = vmatprep.subr.mxu0 0.0
    %102 = vmatpush2.msra.mxu0 0.0
    %103 = vmatprep.subr.mxu0 0.0
    %104 = vmatpush2.msra.mxu0 0.0
    %105 = vmatprep.subr.mxu0 0.0
    %106 = vmatpush2.msra.mxu0 0.0
    %107 = vmatprep.subr.mxu0 0.0
    %108 = vmatpush2.msra.mxu0 0.0
    %109 = vmatprep.subr.mxu0 0.0
    %110 = vmatpush2.msra.mxu0 0.0
    %111 = vmatprep.subr.mxu0 0.0
    %112 = vmatpush2.msra.mxu0 0.0
    %113 = vmatprep.subr.mxu0 0.0
    %114 = vmatpush2.msra.mxu0 0.0
    %115 = vmatprep.subr.mxu0 0.0
    %116 = vmatpush2.msra.mxu0 0.0
    %117 = vmatprep.subr.mxu0 0.0
    %118 = vmatpush2.msra.mxu0 0.0
    %119 = vmatprep.subr.mxu0 0.0
    %120 = vmatpush2.msra.mxu0 0.0
    %121 = vmatprep.subr.mxu0 0.0
    %122 = vmatpush2.msra.mxu0 0.0
    %123 = vmatprep.subr.mxu0 0.0
    %124 = vmatpush2.msra.mxu0 0.0
    %125 = vmatprep.mubr.f32.mxu0 0.0
    %126 = vmatmul.mubr.f32.gmra.mxu0 %v59
    %v127 = vpop.f32.mrf.mxu0
    %v128 = vadd.f32 %v55, %v127
    %v129 = vpop.f32.mrf.mxu0
    %130 = vdwg.mxu0
    %v131 = vmax.f32 %v128, 0.0
    %v132 = vld [vmem:[#allocation2] sm:$0xff]
    %v133 = vld [vmem:[#allocation2 + $0x8] sm:$0xff]
    %v134 = vld [vmem:[#allocation2 + $0x10] sm:$0xff]
    %v135 = vld [vmem:[#allocation2 + $0x18] sm:$0xff]
    %v136 = vld [vmem:[#allocation2 + $0x20] sm:$0xff]
    %v137 = vld [vmem:[#allocation2 + $0x28] sm:$0xff]
    %v138 = vld [vmem:[#allocation2 + $0x30] sm:$0xff]
    %v139 = vld [vmem:[#allocation2 + $0x38] sm:$0xff]
    %v140 = vld [vmem:[%s4] sm:$0x1]
    %v142 = vlaneseq
    %v143 = vshrl.u32 %v142, 7
    %v144 = vsub.s32 0, %v143
    %v145 = vrot.slane %v140, %v144
    %v148 = vsel %vm57, %v131, 0
    %150 = vmatprep.subr.mxu0 0.0
    %151 = vmatpush1.msra.mxu0 0.0
    %152 = vmatprep.subr.mxu0 0.0
    %153 = vmatpush1.msra.mxu0 0.0
    %154 = vmatprep.subr.mxu0 0.0
    %155 = vmatpush1.msra.mxu0 0.0
    %156 = vmatprep.subr.mxu0 0.0
    %157 = vmatpush1.msra.mxu0 0.0
    %158 = vmatprep.subr.mxu0 0.0
    %159 = vmatpush1.msra.mxu0 0.0
    %160 = vmatprep.subr.mxu0 0.0
    %161 = vmatpush1.msra.mxu0 0.0
    %162 = vmatprep.subr.mxu0 0.0
    %163 = vmatpush1.msra.mxu0 0.0
    %164 = vmatprep.subr.mxu0 0.0
    %165 = vmatpush1.msra.mxu0 0.0
    %166 = vmatprep.subr.mxu0 0.0
    %167 = vmatpush1.msra.mxu0 %v139
    %168 = vmatprep.subr.mxu0 0.0
    %169 = vmatpush1.msra.mxu0 %v138
    %170 = vmatprep.subr.mxu0 0.0
    %171 = vmatpush1.msra.mxu0 %v137
    %172 = vmatprep.subr.mxu0 0.0
    %173 = vmatpush1.msra.mxu0 %v136
    %174 = vmatprep.subr.mxu0 0.0
    %175 = vmatpush1.msra.mxu0 %v135
    %176 = vmatprep.subr.mxu0 0.0
    %177 = vmatpush1.msra.mxu0 %v134
    %178 = vmatprep.subr.mxu0 0.0
    %179 = vmatpush1.msra.mxu0 %v133
    %180 = vmatprep.subr.mxu0 0.0
    %181 = vmatpush1.msra.mxu0 %v132
    %182 = vmatprep.subr.mxu0 0.0
    %183 = vmatpush2.msra.mxu0 0.0
    %184 = vmatprep.subr.mxu0 0.0
    %185 = vmatpush2.msra.mxu0 0.0
    %186 = vmatprep.subr.mxu0 0.0
    %187 = vmatpush2.msra.mxu0 0.0
    %188 = vmatprep.subr.mxu0 0.0
    %189 = vmatpush2.msra.mxu0 0.0
    %190 = vmatprep.subr.mxu0 0.0
    %191 = vmatpush2.msra.mxu0 0.0
    %192 = vmatprep.subr.mxu0 0.0
    %193 = vmatpush2.msra.mxu0 0.0
    %194 = vmatprep.subr.mxu0 0.0
    %195 = vmatpush2.msra.mxu0 0.0
    %196 = vmatprep.subr.mxu0 0.0
    %197 = vmatpush2.msra.mxu0 0.0
    %198 = vmatprep.subr.mxu0 0.0
    %199 = vmatpush2.msra.mxu0 0.0
    %200 = vmatprep.subr.mxu0 0.0
    %201 = vmatpush2.msra.mxu0 0.0
    %202 = vmatprep.subr.mxu0 0.0
    %203 = vmatpush2.msra.mxu0 0.0
    %204 = vmatprep.subr.mxu0 0.0
    %205 = vmatpush2.msra.mxu0 0.0
    %206 = vmatprep.subr.mxu0 0.0
    %207 = vmatpush2.msra.mxu0 0.0
    %208 = vmatprep.subr.mxu0 0.0
    %209 = vmatpush2.msra.mxu0 0.0
    %210 = vmatprep.subr.mxu0 0.0
    %211 = vmatpush2.msra.mxu0 0.0
    %212 = vmatprep.subr.mxu0 0.0
    %213 = vmatpush2.msra.mxu0 0.0
    %214 = vmatprep.mubr.f32.mxu0 0.0
    %215 = vmatmul.mubr.f32.gmra.mxu0 %v148
    %v216 = vpop.f32.mrf.mxu0
    %v217 = vadd.f32 %v145, %v216
    %v218 = vpop.f32.mrf.mxu0
    %219 = vdwg.mxu0
    %v220 = vmax.f32 %v217, 0.0
    %v221 = vld [vmem:[%s5] sm:$0xff]
    %v222 = vld [vmem:[%s5 + $0x8] sm:$0xff]
    %v223 = vld [vmem:[%s5 + $0x10] sm:$0xff]
    %v224 = vld [vmem:[%s5 + $0x18] sm:$0xff]
    %v225 = vld [vmem:[%s5 + $0x20] sm:$0xff]
    %v226 = vld [vmem:[%s5 + $0x28] sm:$0xff]
    %v227 = vld [vmem:[%s5 + $0x30] sm:$0xff]
    %v228 = vld [vmem:[%s5 + $0x38] sm:$0xff]
    %v229 = vld [vmem:[%s6] sm:$0x1]
    %v231 = vlaneseq
    %v232 = vshrl.u32 %v231, 7
    %v233 = vsub.s32 0, %v232
    %v234 = vrot.slane %v229, %v233
    %v237 = vsel %vm57, %v220, 0
    %239 = vmatprep.subr.mxu0 0.0
    %240 = vmatpush1.msra.mxu0 0.0
    %241 = vmatprep.subr.mxu0 0.0
    %242 = vmatpush1.msra.mxu0 0.0
    %243 = vmatprep.subr.mxu0 0.0
    %244 = vmatpush1.msra.mxu0 0.0
    %245 = vmatprep.subr.mxu0 0.0
    %246 = vmatpush1.msra.mxu0 0.0
    %247 = vmatprep.subr.mxu0 0.0
    %248 = vmatpush1.msra.mxu0 0.0
    %249 = vmatprep.subr.mxu0 0.0
    %250 = vmatpush1.msra.mxu0 0.0
    %251 = vmatprep.subr.mxu0 0.0
    %252 = vmatpush1.msra.mxu0 0.0
    %253 = vmatprep.subr.mxu0 0.0
    %254 = vmatpush1.msra.mxu0 0.0
    %255 = vmatprep.subr.mxu0 0.0
    %256 = vmatpush1.msra.mxu0 %v228
    %257 = vmatprep.subr.mxu0 0.0
    %258 = vmatpush1.msra.mxu0 %v227
    %259 = vmatprep.subr.mxu0 0.0
    %260 = vmatpush1.msra.mxu0 %v226
    %261 = vmatprep.subr.mxu0 0.0
    %262 = vmatpush1.msra.mxu0 %v225
    %263 = vmatprep.subr.mxu0 0.0
    %264 = vmatpush1.msra.mxu0 %v224
    %265 = vmatprep.subr.mxu0 0.0
    %266 = vmatpush1.msra.mxu0 %v223
    %267 = vmatprep.subr.mxu0 0.0
    %268 = vmatpush1.msra.mxu0 %v222
    %269 = vmatprep.subr.mxu0 0.0
    %270 = vmatpush1.msra.mxu0 %v221
    %271 = vmatprep.subr.mxu0 0.0
    %272 = vmatpush2.msra.mxu0 0.0
    %273 = vmatprep.subr.mxu0 0.0
    %274 = vmatpush2.msra.mxu0 0.0
    %275 = vmatprep.subr.mxu0 0.0
    %276 = vmatpush2.msra.mxu0 0.0
    %277 = vmatprep.subr.mxu0 0.0
    %278 = vmatpush2.msra.mxu0 0.0
    %279 = vmatprep.subr.mxu0 0.0
    %280 = vmatpush2.msra.mxu0 0.0
    %281 = vmatprep.subr.mxu0 0.0
    %282 = vmatpush2.msra.mxu0 0.0
    %283 = vmatprep.subr.mxu0 0.0
    %284 = vmatpush2.msra.mxu0 0.0
    %285 = vmatprep.subr.mxu0 0.0
    %286 = vmatpush2.msra.mxu0 0.0
    %287 = vmatprep.subr.mxu0 0.0
    %288 = vmatpush2.msra.mxu0 0.0
    %289 = vmatprep.subr.mxu0 0.0
    %290 = vmatpush2.msra.mxu0 0.0
    %291 = vmatprep.subr.mxu0 0.0
    %292 = vmatpush2.msra.mxu0 0.0
    %293 = vmatprep.subr.mxu0 0.0
    %294 = vmatpush2.msra.mxu0 0.0
    %295 = vmatprep.subr.mxu0 0.0
    %296 = vmatpush2.msra.mxu0 0.0
    %297 = vmatprep.subr.mxu0 0.0
    %298 = vmatpush2.msra.mxu0 0.0
    %299 = vmatprep.subr.mxu0 0.0
    %300 = vmatpush2.msra.mxu0 0.0
    %301 = vmatprep.subr.mxu0 0.0
    %302 = vmatpush2.msra.mxu0 0.0
    %303 = vmatprep.mubr.f32.mxu0 0.0
    %304 = vmatmul.mubr.f32.gmra.mxu0 %v237
    %v305 = vpop.f32.mrf.mxu0
    %v306 = vadd.f32 %v234, %v305
    %v307 = vpop.f32.mrf.mxu0
    %308 = vdwg.mxu0
    %v309 = vmax.f32 %v306, 0.0
    %vm310 = vcmask 261120
    %311 = vst.msk [vmem:[#allocation5] sm:$0xff] %vm310, %v309
    // Predicated region
    $region34: #{_mlp_forward_jit.1} parent=1 // pred_check
      _
    $region35: #{_mlp_forward_jit.1} parent=1 // pred_check_branch
      %313 = sbr.rel (0) target = $region37
    $region36: #{_mlp_forward_jit.1} parent=1 // pred_region
      %s315 = ssub.s32 128, 128
      %316 = vsyncadd [#allocation4], %s315
      %s318 = sshll.u32 [#allocation5], 4
      %s319 = int_to_ptr.vmem [resolvable:$true] %s318
      %321 = dma.vmem_to_hbm [thread:$0]  %s319, 128, %s7, [#allocation4]
    $region37: #{_mlp_forward_jit.1} parent=1 // pred_fallthru
      _
    // Predicated region
    $region38: #{_mlp_forward_jit.1} parent=1 // pred_check
      _
    $region39: #{_mlp_forward_jit.1} parent=1 // pred_check_branch
      %323 = sbr.rel (0) target = $region41
    $region40: #{_mlp_forward_jit.1} parent=1 // pred_region
      %324 = dma.done [#allocation4], 128
    $region41: #{_mlp_forward_jit.1} parent=1 // pred_fallthru
      _
    %325 = vsyncpa [#allocation3], 1
    %326 = vsyncpa [#allocation4], 1

</llo_original>
